<compile_context>
chip_gen: v7x
topology: tpu7x:2x2x1
jax: 0.10.0
libtpu: 0.0.40
codegen_flags: <defaults>
</compile_context>

<pallas_src>
import functools
import math

import jax
import jax.numpy as jnp
from jax import lax
from jax.experimental import pallas as pl
from jax.experimental.pallas import tpu as pltpu


# --------------------------------------------------------------------------- #
# Pallas kernels
# --------------------------------------------------------------------------- #

def _grouped_expert_kernel(ids_ref, valid_ref,          # scalar-prefetch (SMEM)
                           xs_ref, ws_ref,              # gathered tokens / combine weights
                           wg_ref, wu_ref, wd_ref,      # ONE expert's weight chunk per step
                           o_ref,                       # per-assignment weighted output
                           acc_ref):                    # f32 accumulator (VMEM scratch)
    b = pl.program_id(0)             # row block (chunk of a single expert's group)
    i = pl.program_id(1)             # intermediate-dim chunk
    n_i = pl.num_programs(1)

    @pl.when(i == 0)
    def _init():
        acc_ref[...] = jnp.zeros_like(acc_ref)

    # Skip compute for trailing padding-only blocks.  SMEM predicate -> no vector
    # reduce, and the wrapper pins their expert id so no fresh weight DMA either.
    @pl.when(valid_ref[b] != 0)
    def _compute():
        x = xs_ref[...]
        g = jnp.dot(x, wg_ref[0], preferred_element_type=jnp.float32)
        u = jnp.dot(x, wu_ref[0], preferred_element_type=jnp.float32)
        h = (jax.nn.silu(g) * u).astype(wd_ref.dtype)
        acc_ref[...] += jnp.dot(h, wd_ref[0], preferred_element_type=jnp.float32)

    @pl.when(i == n_i - 1)
    def _store():
        o_ref[...] = (ws_ref[...] * acc_ref[...]).astype(o_ref.dtype)


def _shared_expert_kernel(x_ref, sg_ref, su_ref, sd_ref, o_ref):
    x = x_ref[...]
    g = jnp.dot(x, sg_ref[...], preferred_element_type=jnp.float32)
    u = jnp.dot(x, su_ref[...], preferred_element_type=jnp.float32)
    h = (jax.nn.silu(g) * u).astype(sd_ref.dtype)
    o_ref[...] = jnp.dot(h, sd_ref[...],
                         preferred_element_type=jnp.float32).astype(o_ref.dtype)


# --------------------------------------------------------------------------- #
# Tiling / budget helpers (shape-only, jit-safe)
# --------------------------------------------------------------------------- #

def _vmem_budget_bytes() -> int:
    """7/8 of physical VMEM: ~112 MiB on v5e/v6e, ~56 MiB on v7x."""
    cap = 128 << 20
    try:
        info = pltpu.get_tpu_info()
        cap = int(getattr(info, "vmem_capacity_bytes", cap))
    except Exception:
        pass
    return (cap * 7) // 8


def _pick_row_block(total_rows: int, n_experts: int) -> int:
    """MXU-aligned row block, sized to the expected rows-per-expert."""
    per = max(1, -(-total_rows // max(n_experts, 1)))
    if per >= 512:
        return 512
    if per >= 256:
        return 256
    if per >= 128:
        return 128
    return max(8, ((per + 7) // 8) * 8)


def _pick_inner_block(inner: int, cap: int = 512) -> int:
    """Chunk of the expert intermediate dim (must divide it)."""
    if inner <= cap:
        return inner
    for c in (512, 256, 128):
        if inner % c == 0:
            return c
    return inner


def _pick_divisor_block(n: int, cap: int = 512) -> int:
    """Largest divisor of n that is <= cap and a multiple of 8 (or n itself)."""
    for c in range(min(cap, n), 0, -1):
        if n % c == 0 and (c % 8 == 0 or c == n):
            return c
    return n


# --------------------------------------------------------------------------- #
# Wrapper
# --------------------------------------------------------------------------- #

def sigma_moe(x, gate_w, wg, wu, wd, sg, su, sd, *, top_k: int, row_block=None):
    """x: (..., D).  Returns the same shape (mirrors hidden_states.view(-1, D))."""
    orig_shape = x.shape
    D = orig_shape[-1]
    xf = x.reshape(-1, D)
    T = xf.shape[0]
    E, _, I = wg.shape
    Is = sg.shape[1]
    n_assign = T * top_k

    # ----------------------- routing + sort-by-expert (XLA) ------------------
    scores = jax.nn.softmax(xf @ gate_w.T, axis=-1)                  # (T, E)
    topk_w, topk_idx = lax.top_k(scores, top_k)                      # (T, K)

    tb = _pick_row_block(n_assign, E) if row_block is None else row_block
    num_blocks = -(-n_assign // tb) + E          # static worst-case padded block count
    g_rows = num_blocks * tb

    flat_expert = topk_idx.reshape(-1).astype(jnp.int32)             # (T*K,)
    flat_weight = topk_w.reshape(-1).astype(jnp.float32)
    flat_token = jnp.repeat(jnp.arange(T, dtype=jnp.int32), top_k)

    order = jnp.argsort(flat_expert)                                  # stable
    s_expert = flat_expert[order]
    s_token = flat_token[order]
    s_weight = flat_weight[order]

    group_sizes = jnp.bincount(flat_expert, length=E)                 # (E,)
    padded_sizes = ((group_sizes + tb - 1) // tb) * tb
    group_starts = jnp.cumsum(group_sizes) - group_sizes
    padded_starts = jnp.cumsum(padded_sizes) - padded_sizes
    rank = jnp.arange(n_assign, dtype=jnp.int32) - group_starts[s_expert]
    dest = (padded_starts[s_expert] + rank).astype(jnp.int32)         # padded row per assignment

    xs = jnp.zeros((g_rows, D), xf.dtype).at[dest].set(xf[s_token])
    ws = jnp.zeros((g_rows, 1), jnp.float32).at[dest].set(s_weight[:, None])

    padded_ends = jnp.cumsum(padded_sizes)
    total_padded = padded_ends[-1]
    block_starts = jnp.arange(num_blocks, dtype=jnp.int32) * tb
    ids_raw = jnp.minimum(
        jnp.searchsorted(padded_ends, block_starts, side="right"), E - 1
    ).astype(jnp.int32)
    block_valid = (block_starts < total_padded).astype(jnp.int32)
    last_valid = jnp.maximum(total_padded // tb - 1, 0)
    # Pin padding-only blocks to the last valid block's expert -> no extra weight DMA.
    block_ids = jnp.where(block_valid == 1, ids_raw, ids_raw[last_valid]).astype(jnp.int32)

    # ----------------------- grouped expert MLP (Pallas) ---------------------
    ti = _pick_inner_block(I)
    n_i = I // ti
    vmem_cap = _vmem_budget_bytes()
    x_item = xf.dtype.itemsize
    w_item = wg.dtype.itemsize
    est = (2 * (tb * D * x_item + tb * 4
                + (2 * D * ti + ti * D) * w_item
                + tb * D * 4)
           + tb * D * 4)
    vmem_limit = int(min(max(est + (8 << 20), 32 << 20), vmem_cap))

    ys = pl.pallas_call(
        _grouped_expert_kernel,
        out_shape=jax.ShapeDtypeStruct((g_rows, D), jnp.float32),
        grid_spec=pltpu.PrefetchScalarGridSpec(
            num_scalar_prefetch=2,
            grid=(num_blocks, n_i),
            in_specs=[
                pl.BlockSpec((tb, D), lambda b, i, ids, val: (b, 0)),            # gathered tokens
                pl.BlockSpec((tb, 1), lambda b, i, ids, val: (b, 0)),            # combine weights
                pl.BlockSpec((1, D, ti), lambda b, i, ids, val: (ids[b], 0, i)),  # gate_proj chunk
                pl.BlockSpec((1, D, ti), lambda b, i, ids, val: (ids[b], 0, i)),  # up_proj chunk
                pl.BlockSpec((1, ti, D), lambda b, i, ids, val: (ids[b], i, 0)),  # down_proj chunk
            ],
            out_specs=pl.BlockSpec((tb, D), lambda b, i, ids, val: (b, 0)),
            scratch_shapes=[pltpu.VMEM((tb, D), jnp.float32)],
        ),
        compiler_params=pltpu.CompilerParams(
            dimension_semantics=("parallel", "arbitrary"),
            vmem_limit_bytes=vmem_limit,
        ),
    )(block_ids, block_valid, xs, ws, wg, wu, wd)

    # Un-sort + combine the top_k contributions per token (gather + sum, XLA).
    row_of = jnp.zeros((n_assign,), jnp.int32).at[order].set(dest)
    y = ys[row_of].reshape(T, top_k, D).sum(axis=1)                   # f32

    # ----------------------- shared expert (Pallas) --------------------------
    tbs = _pick_divisor_block(T)
    s_item = sg.dtype.itemsize
    est_s = 2 * (tbs * D * x_item + (2 * D * Is + Is * D) * s_item + tbs * D * 4)
    vmem_limit_s = int(min(max(est_s + (8 << 20), 32 << 20), vmem_cap))

    shared = pl.pallas_call(
        _shared_expert_kernel,
        out_shape=jax.ShapeDtypeStruct((T, D), jnp.float32),
        grid_spec=pltpu.PrefetchScalarGridSpec(
            num_scalar_prefetch=0,
            grid=(T // tbs,),
            in_specs=[
                pl.BlockSpec((tbs, D), lambda t: (t, 0)),
                pl.BlockSpec((D, Is), lambda t: (0, 0)),
                pl.BlockSpec((D, Is), lambda t: (0, 0)),
                pl.BlockSpec((Is, D), lambda t: (0, 0)),
            ],
            out_specs=pl.BlockSpec((tbs, D), lambda t: (t, 0)),
        ),
        compiler_params=pltpu.CompilerParams(
            dimension_semantics=("parallel",),
            vmem_limit_bytes=vmem_limit_s,
        ),
    )(xf, sg, su, sd)

    out = (y + shared).astype(x.dtype)
    return out.reshape(orig_shape)


# --------------------------------------------------------------------------- #
# Plain-JAX reference (mirrors the PyTorch module)
# --------------------------------------------------------------------------- #

def sigma_moe_ref(x, gate_w, wg, wu, wd, sg, su, sd, *, top_k: int):
    orig_shape = x.shape
    D = orig_shape[-1]
    xf = x.reshape(-1, D)
    scores = jax.nn.softmax(xf @ gate_w.T, axis=-1)                   # (T, E)
    topk_w, topk_idx = lax.top_k(scores, top_k)                       # (T, K)
    E = wg.shape[0]
    dense_w = jnp.zeros_like(scores)
    for k in range(top_k):
        dense_w = dense_w + jax.nn.one_hot(topk_idx[:, k], E) * topk_w[:, k:k + 1]

    def expert(xx, g, u, d):
        return (jax.nn.silu(xx @ g) * (xx @ u)) @ d

    y = jnp.zeros_like(xf)
    for e in range(E):
        y = y + dense_w[:, e:e + 1] * expert(xf, wg[e], wu[e], wd[e])
    y = y + expert(xf, sg, su, sd)
    return y.reshape(orig_shape)


if __name__ == "__main__":
    # Small config consistent with the module.
    batch, seq, hidden = 2, 8, 32
    n_routed_experts = 4
    moe_intermediate_size = 32
    num_experts_per_tok = 2
    n_shared_experts = 1
    shared_intermediate = moe_intermediate_size * n_shared_experts

    key = jax.random.PRNGKey(0)
    ks = jax.random.split(key, 8)
    scale = 1.0 / math.sqrt(hidden)
    x = jax.random.normal(ks[0], (batch, seq, hidden), jnp.float32)
    gate_w = jax.random.normal(ks[1], (n_routed_experts, hidden), jnp.float32) * scale
    wg = jax.random.normal(ks[2], (n_routed_experts, hidden, moe_intermediate_size), jnp.float32) * scale
    wu = jax.random.normal(ks[3], (n_routed_experts, hidden, moe_intermediate_size), jnp.float32) * scale
    wd = jax.random.normal(ks[4], (n_routed_experts, moe_intermediate_size, hidden), jnp.float32) * scale
    sg = jax.random.normal(ks[5], (hidden, shared_intermediate), jnp.float32) * scale
    su = jax.random.normal(ks[6], (hidden, shared_intermediate), jnp.float32) * scale
    sd = jax.random.normal(ks[7], (shared_intermediate, hidden), jnp.float32) * scale

    moe_fn = jax.jit(functools.partial(sigma_moe, top_k=num_experts_per_tok))
    out = moe_fn(x, gate_w, wg, wu, wd, sg, su, sd)
    out = jax.block_until_ready(out)

    ref = sigma_moe_ref(x, gate_w, wg, wu, wd, sg, su, sd, top_k=num_experts_per_tok)
    assert out.shape == x.shape
    assert jnp.allclose(out, ref, rtol=1e-4, atol=1e-4), "mismatch vs reference"
    print("KERNEL_OK")
</pallas_src>

<mosaic_0001>
module attributes {stable_mosaic.version = 11 : i64} {
  func.func private @main(%arg0: i32) attributes {dimension_semantics = [#tpu.dimension_semantics<core_parallel>], iteration_bounds = array<i64: 2>, tpu.core_type = #tpu.core_type<sc_scalar_subcore>, window_params = []} {
    return
  }
}

module attributes {stable_mosaic.version = 11 : i64} {
  func.func private @main(%arg0: i32) attributes {dimension_semantics = [#tpu.dimension_semantics<core_parallel>], iteration_bounds = array<i64: 2>, tpu.core_type = #tpu.core_type<sc_scalar_subcore>, window_params = []} {
    return
  }
}

module attributes {stable_mosaic.version = 11 : i64} {
  func.func @_shared_expert_kernel(%arg0: i32, %arg1: memref<16x32xf32, #tpu.memory_space<vmem>>, %arg2: memref<32x32xf32, #tpu.memory_space<vmem>>, %arg3: memref<32x32xf32, #tpu.memory_space<vmem>>, %arg4: memref<32x32xf32, #tpu.memory_space<vmem>>, %arg5: memref<16x32xf32, #tpu.memory_space<vmem>>) attributes {dimension_semantics = [#tpu.dimension_semantics<parallel>], iteration_bounds = array<i64: 1>, scalar_prefetch = 0 : i64, scratch_operands = 0 : i64, tpu.core_type = #tpu.core_type<tc>, window_params = [{transform_indices = @transform_0, window_bounds = array<i64: 16, 32>}, {pipeline_mode = #tpu.pipeline_mode<synchronous>, transform_indices = @transform_1, window_bounds = array<i64: 32, 32>}, {pipeline_mode = #tpu.pipeline_mode<synchronous>, transform_indices = @transform_2, window_bounds = array<i64: 32, 32>}, {pipeline_mode = #tpu.pipeline_mode<synchronous>, transform_indices = @transform_3, window_bounds = array<i64: 32, 32>}, {transform_indices = @transform_4, window_bounds = array<i64: 16, 32>}]} {
    %c0 = arith.constant 0 : index
    %c0_0 = arith.constant 0 : index
    %0 = vector.load %arg1[%c0, %c0_0] : memref<16x32xf32, #tpu.memory_space<vmem>>, vector<16x32xf32>
    %c0_1 = arith.constant 0 : index
    %c0_2 = arith.constant 0 : index
    %1 = vector.load %arg2[%c0_1, %c0_2] : memref<32x32xf32, #tpu.memory_space<vmem>>, vector<32x32xf32>
    %cst = arith.constant dense<0.000000e+00> : vector<16x32xf32>
    %2 = tpu.matmul %0, %1, %cst {dimension_numbers = #tpu.dot_dimension_numbers<[1], [0], [0], [1], [0, 0, 1, 1], [], []>} : vector<16x32xf32>, vector<32x32xf32>, vector<16x32xf32> -> vector<16x32xf32>
    %c0_3 = arith.constant 0 : index
    %c0_4 = arith.constant 0 : index
    %3 = vector.load %arg3[%c0_3, %c0_4] : memref<32x32xf32, #tpu.memory_space<vmem>>, vector<32x32xf32>
    %cst_5 = arith.constant dense<0.000000e+00> : vector<16x32xf32>
    %4 = tpu.matmul %0, %3, %cst_5 {dimension_numbers = #tpu.dot_dimension_numbers<[1], [0], [0], [1], [0, 0, 1, 1], [], []>} : vector<16x32xf32>, vector<32x32xf32>, vector<16x32xf32> -> vector<16x32xf32>
    %5 = arith.negf %2 : vector<16x32xf32>
    %6 = math.exp %5 : vector<16x32xf32>
    %cst_6 = arith.constant 1.000000e+00 : f32
    %7 = vector.broadcast %cst_6 : f32 to vector<16x32xf32>
    %8 = arith.addf %7, %6 : vector<16x32xf32>
    %9 = arith.divf %7, %8 : vector<16x32xf32>
    %10 = arith.mulf %2, %9 : vector<16x32xf32>
    %11 = arith.mulf %10, %4 : vector<16x32xf32>
    %c0_7 = arith.constant 0 : index
    %c0_8 = arith.constant 0 : index
    %12 = vector.load %arg4[%c0_7, %c0_8] : memref<32x32xf32, #tpu.memory_space<vmem>>, vector<32x32xf32>
    %cst_9 = arith.constant dense<0.000000e+00> : vector<16x32xf32>
    %13 = tpu.matmul %11, %12, %cst_9 {dimension_numbers = #tpu.dot_dimension_numbers<[1], [0], [0], [1], [0, 0, 1, 1], [], []>} : vector<16x32xf32>, vector<32x32xf32>, vector<16x32xf32> -> vector<16x32xf32>
    %c0_10 = arith.constant 0 : index
    %c0_11 = arith.constant 0 : index
    %14 = vector.load %arg5[%c0_10, %c0_11] : memref<16x32xf32, #tpu.memory_space<vmem>>, vector<16x32xf32>
    tpu.vector_store %arg5[%c0_10, %c0_11], %13 {strides = array<i32>} : memref<16x32xf32, #tpu.memory_space<vmem>>, vector<16x32xf32>,
    return
  }
  func.func @transform_0(%arg0: i32) -> (i32, i32) {
    %c0_i32 = arith.constant 0 : i32
    %c0_i32_0 = arith.constant 0 : i32
    return %arg0, %c0_i32 : i32, i32
  }
  func.func @transform_1(%arg0: i32) -> (i32, i32) {
    %c0_i32 = arith.constant 0 : i32
    %c0_i32_0 = arith.constant 0 : i32
    %c0_i32_1 = arith.constant 0 : i32
    return %c0_i32, %c0_i32_0 : i32, i32
  }
  func.func @transform_2(%arg0: i32) -> (i32, i32) {
    %c0_i32 = arith.constant 0 : i32
    %c0_i32_0 = arith.constant 0 : i32
    %c0_i32_1 = arith.constant 0 : i32
    return %c0_i32, %c0_i32_0 : i32, i32
  }
  func.func @transform_3(%arg0: i32) -> (i32, i32) {
    %c0_i32 = arith.constant 0 : i32
    %c0_i32_0 = arith.constant 0 : i32
    %c0_i32_1 = arith.constant 0 : i32
    return %c0_i32, %c0_i32_0 : i32, i32
  }
  func.func @transform_4(%arg0: i32) -> (i32, i32) {
    %c0_i32 = arith.constant 0 : i32
    %c0_i32_0 = arith.constant 0 : i32
    return %arg0, %c0_i32 : i32, i32
  }
}

module attributes {stable_mosaic.version = 11 : i64} {
  func.func @_grouped_expert_kernel(%arg0: i32, %arg1: i32, %arg2: memref<8xi32, #tpu.memory_space<smem>>, %arg3: memref<8xi32, #tpu.memory_space<smem>>, %arg4: memref<8x32xf32, #tpu.memory_space<vmem>>, %arg5: memref<8x1xf32, #tpu.memory_space<vmem>>, %arg6: memref<1x32x32xf32, #tpu.memory_space<vmem>>, %arg7: memref<1x32x32xf32, #tpu.memory_space<vmem>>, %arg8: memref<1x32x32xf32, #tpu.memory_space<vmem>>, %arg9: memref<8x32xf32, #tpu.memory_space<vmem>>, %arg10: memref<8x32xf32, #tpu.memory_space<vmem>>) attributes {dimension_semantics = [#tpu.dimension_semantics<parallel>, #tpu.dimension_semantics<arbitrary>], iteration_bounds = array<i64: 8, 1>, scalar_prefetch = 2 : i64, scratch_operands = 1 : i64, tpu.core_type = #tpu.core_type<tc>, window_params = [{transform_indices = @transform_0, window_bounds = array<i64: 8, 32>}, {transform_indices = @transform_1, window_bounds = array<i64: 8, 1>}, {transform_indices = @transform_2, window_bounds = array<i64: 1, 32, 32>}, {transform_indices = @transform_3, window_bounds = array<i64: 1, 32, 32>}, {transform_indices = @transform_4, window_bounds = array<i64: 1, 32, 32>}, {transform_indices = @transform_5, window_bounds = array<i64: 8, 32>}]} {
    %c0_i32 = arith.constant 0 : i32
    %0 = arith.cmpi eq, %arg1, %c0_i32 : i32
    %1 = arith.extui %0 : i1 to i32
    %c0_i32_0 = arith.constant 0 : i32
    %2 = arith.cmpi ne, %1, %c0_i32_0 : i32
    scf.if %2 {
      %cst = arith.constant 0.000000e+00 : f32
      %11 = vector.broadcast %cst : f32 to vector<8x32xf32>
      %c0 = arith.constant 0 : index
      %c0_5 = arith.constant 0 : index
      %12 = vector.load %arg10[%c0, %c0_5] : memref<8x32xf32, #tpu.memory_space<vmem>>, vector<8x32xf32>
      tpu.vector_store %arg10[%c0, %c0_5], %11 {strides = array<i32>} : memref<8x32xf32, #tpu.memory_space<vmem>>, vector<8x32xf32>,
    } else {
    }
    %3 = arith.index_cast %arg0 : i32 to index
    %4 = memref.load %arg3[%3] : memref<8xi32, #tpu.memory_space<smem>>
    %c0_i32_1 = arith.constant 0 : i32
    %5 = arith.cmpi ne, %4, %c0_i32_1 : i32
    %6 = arith.extui %5 : i1 to i32
    %c0_i32_2 = arith.constant 0 : i32
    %7 = arith.cmpi ne, %6, %c0_i32_2 : i32
    scf.if %7 {
      %c0 = arith.constant 0 : index
      %c0_5 = arith.constant 0 : index
      %11 = vector.load %arg4[%c0, %c0_5] : memref<8x32xf32, #tpu.memory_space<vmem>>, vector<8x32xf32>
      %c0_6 = arith.constant 0 : index
      %c0_7 = arith.constant 0 : index
      %c0_8 = arith.constant 0 : index
      %12 = vector.load %arg6[%c0_6, %c0_7, %c0_8] : memref<1x32x32xf32, #tpu.memory_space<vmem>>, vector<1x32x32xf32>
      %13 = vector.shape_cast %12 : vector<1x32x32xf32> to vector<32x32xf32>
      %cst = arith.constant dense<0.000000e+00> : vector<8x32xf32>
      %14 = tpu.matmul %11, %13, %cst {dimension_numbers = #tpu.dot_dimension_numbers<[1], [0], [0], [1], [0, 0, 1, 1], [], []>} : vector<8x32xf32>, vector<32x32xf32>, vector<8x32xf32> -> vector<8x32xf32>
      %c0_9 = arith.constant 0 : index
      %c0_10 = arith.constant 0 : index
      %c0_11 = arith.constant 0 : index
      %15 = vector.load %arg7[%c0_9, %c0_10, %c0_11] : memref<1x32x32xf32, #tpu.memory_space<vmem>>, vector<1x32x32xf32>
      %16 = vector.shape_cast %15 : vector<1x32x32xf32> to vector<32x32xf32>
      %cst_12 = arith.constant dense<0.000000e+00> : vector<8x32xf32>
      %17 = tpu.matmul %11, %16, %cst_12 {dimension_numbers = #tpu.dot_dimension_numbers<[1], [0], [0], [1], [0, 0, 1, 1], [], []>} : vector<8x32xf32>, vector<32x32xf32>, vector<8x32xf32> -> vector<8x32xf32>
      %18 = arith.negf %14 : vector<8x32xf32>
      %19 = math.exp %18 : vector<8x32xf32>
      %cst_13 = arith.constant 1.000000e+00 : f32
      %20 = vector.broadcast %cst_13 : f32 to vector<8x32xf32>
      %21 = arith.addf %20, %19 : vector<8x32xf32>
      %22 = arith.divf %20, %21 : vector<8x32xf32>
      %23 = arith.mulf %14, %22 : vector<8x32xf32>
      %24 = arith.mulf %23, %17 : vector<8x32xf32>
      %c0_14 = arith.constant 0 : index
      %c0_15 = arith.constant 0 : index
      %25 = vector.load %arg10[%c0_14, %c0_15] : memref<8x32xf32, #tpu.memory_space<vmem>>, vector<8x32xf32>
      %c0_16 = arith.constant 0 : index
      %c0_17 = arith.constant 0 : index
      %c0_18 = arith.constant 0 : index
      %26 = vector.load %arg8[%c0_16, %c0_17, %c0_18] : memref<1x32x32xf32, #tpu.memory_space<vmem>>, vector<1x32x32xf32>
      %27 = vector.shape_cast %26 : vector<1x32x32xf32> to vector<32x32xf32>
      %cst_19 = arith.constant dense<0.000000e+00> : vector<8x32xf32>
      %28 = tpu.matmul %24, %27, %cst_19 {dimension_numbers = #tpu.dot_dimension_numbers<[1], [0], [0], [1], [0, 0, 1, 1], [], []>} : vector<8x32xf32>, vector<32x32xf32>, vector<8x32xf32> -> vector<8x32xf32>
      %29 = arith.addf %25, %28 : vector<8x32xf32>
      %c0_20 = arith.constant 0 : index
      %c0_21 = arith.constant 0 : index
      %30 = vector.load %arg10[%c0_20, %c0_21] : memref<8x32xf32, #tpu.memory_space<vmem>>, vector<8x32xf32>
      tpu.vector_store %arg10[%c0_20, %c0_21], %29 {strides = array<i32>} : memref<8x32xf32, #tpu.memory_space<vmem>>, vector<8x32xf32>,
    } else {
    }
    %c0_i32_3 = arith.constant 0 : i32
    %8 = arith.cmpi eq, %arg1, %c0_i32_3 : i32
    %9 = arith.extui %8 : i1 to i32
    %c0_i32_4 = arith.constant 0 : i32
    %10 = arith.cmpi ne, %9, %c0_i32_4 : i32
    scf.if %10 {
      %c0 = arith.constant 0 : index
      %c0_5 = arith.constant 0 : index
      %11 = vector.load %arg5[%c0, %c0_5] : memref<8x1xf32, #tpu.memory_space<vmem>>, vector<8x1xf32>
      %c0_6 = arith.constant 0 : index
      %c0_7 = arith.constant 0 : index
      %12 = vector.load %arg10[%c0_6, %c0_7] : memref<8x32xf32, #tpu.memory_space<vmem>>, vector<8x32xf32>
      %13 = vector.broadcast %11 : vector<8x1xf32> to vector<8x32xf32>
      %14 = arith.mulf %13, %12 : vector<8x32xf32>
      %c0_8 = arith.constant 0 : index
      %c0_9 = arith.constant 0 : index
      %15 = vector.load %arg9[%c0_8, %c0_9] : memref<8x32xf32, #tpu.memory_space<vmem>>, vector<8x32xf32>
      tpu.vector_store %arg9[%c0_8, %c0_9], %14 {strides = array<i32>} : memref<8x32xf32, #tpu.memory_space<vmem>>, vector<8x32xf32>,
    } else {
    }
    return
  }
  func.func @transform_0(%arg0: i32, %arg1: i32, %arg2: memref<8xi32, #tpu.memory_space<smem>>, %arg3: memref<8xi32, #tpu.memory_space<smem>>) -> (i32, i32) {
    %c0_i32 = arith.constant 0 : i32
    %c0_i32_0 = arith.constant 0 : i32
    return %arg0, %c0_i32 : i32, i32
  }
  func.func @transform_1(%arg0: i32, %arg1: i32, %arg2: memref<8xi32, #tpu.memory_space<smem>>, %arg3: memref<8xi32, #tpu.memory_space<smem>>) -> (i32, i32) {
    %c0_i32 = arith.constant 0 : i32
    %c0_i32_0 = arith.constant 0 : i32
    return %arg0, %c0_i32 : i32, i32
  }
  func.func @transform_2(%arg0: i32, %arg1: i32, %arg2: memref<8xi32, #tpu.memory_space<smem>>, %arg3: memref<8xi32, #tpu.memory_space<smem>>) -> (i32, i32, i32) {
    %0 = arith.index_cast %arg0 : i32 to index
    %1 = memref.load %arg2[%0] : memref<8xi32, #tpu.memory_space<smem>>
    %c0_i32 = arith.constant 0 : i32
    %c0_i32_0 = arith.constant 0 : i32
    return %1, %c0_i32, %arg1 : i32, i32, i32
  }
  func.func @transform_3(%arg0: i32, %arg1: i32, %arg2: memref<8xi32, #tpu.memory_space<smem>>, %arg3: memref<8xi32, #tpu.memory_space<smem>>) -> (i32, i32, i32) {
    %0 = arith.index_cast %arg0 : i32 to index
    %1 = memref.load %arg2[%0] : memref<8xi32, #tpu.memory_space<smem>>
    %c0_i32 = arith.constant 0 : i32
    %c0_i32_0 = arith.constant 0 : i32
    return %1, %c0_i32, %arg1 : i32, i32, i32
  }
  func.func @transform_4(%arg0: i32, %arg1: i32, %arg2: memref<8xi32, #tpu.memory_space<smem>>, %arg3: memref<8xi32, #tpu.memory_space<smem>>) -> (i32, i32, i32) {
    %0 = arith.index_cast %arg0 : i32 to index
    %1 = memref.load %arg2[%0] : memref<8xi32, #tpu.memory_space<smem>>
    %c0_i32 = arith.constant 0 : i32
    %c0_i32_0 = arith.constant 0 : i32
    return %1, %arg1, %c0_i32 : i32, i32, i32
  }
  func.func @transform_5(%arg0: i32, %arg1: i32, %arg2: memref<8xi32, #tpu.memory_space<smem>>, %arg3: memref<8xi32, #tpu.memory_space<smem>>) -> (i32, i32) {
    %c0_i32 = arith.constant 0 : i32
    %c0_i32_0 = arith.constant 0 : i32
    return %arg0, %c0_i32 : i32, i32
  }
}

</mosaic_0001>

<llo_original>
// kernel: custom-call
$region0: #{custom-call}
  %s0 = inlined_call_operand.vmem [shape: u32[8], index: 0, kind: output, shape index: {}]

// kernel: sigma_moe.3
$region0: #{sigma_moe.3}
  #allocation0 [shape = 'u32[]', space=smem, size = 0x4, offset = 0x4, fixed_abs, tag = 'smem constant byte address 0x4 - core index']
  #allocation1 [shape = 'u32[144,128]{1,0:T(1,128)}', space=vmem, size = 0x12000, scoped, tag = 'internal scratch']
  %s0 = inlined_call_operand.vmem [shape: f32[16,32], index: 0, kind: input, shape index: {}]
  %s1 = inlined_call_operand.vmem [shape: f32[32,32], index: 1, kind: input, shape index: {}]
  %s2 = inlined_call_operand.vmem [shape: f32[32,32], index: 2, kind: input, shape index: {}]
  %s3 = inlined_call_operand.vmem [shape: f32[32,32], index: 3, kind: input, shape index: {}]
  %s4 = inlined_call_operand.vmem [shape: f32[16,32], index: 4, kind: output, shape index: {}]
  %s5 = sld [smem:[#allocation0]]
  $region26: #{sigma_moe.3} parent=0
    _
  %s7 = ssub.s32 1, %s5
  %s8 = scalar_select 0, %s7, %s5
  // Predicated region
  $region2: #{sigma_moe.3} parent=0 // pred_check
    _
  $region3: #{sigma_moe.3} parent=0 // pred_check_branch
    %10 = sbr.rel (0) target = $region5
  $region4: #{sigma_moe.3} parent=0 // pred_region
    _
  $region5: #{sigma_moe.3} parent=0 // pred_fallthru
    _
  // Predicated region
  $region6: #{sigma_moe.3} parent=0 // pred_check
    _
  $region7: #{sigma_moe.3} parent=0 // pred_check_branch
    %12 = sbr.rel (0) target = $region9
  $region8: #{sigma_moe.3} parent=0 // pred_region
    _
  $region9: #{sigma_moe.3} parent=0 // pred_fallthru
    _
  // Predicated region
  $region10: #{sigma_moe.3} parent=0 // pred_check
    _
  $region11: #{sigma_moe.3} parent=0 // pred_check_branch
    %14 = sbr.rel (0) target = $region13
  $region12: #{sigma_moe.3} parent=0 // pred_region
    _
  $region13: #{sigma_moe.3} parent=0 // pred_fallthru
    _
  // Predicated region
  $region14: #{sigma_moe.3} parent=0 // pred_check
    _
  $region15: #{sigma_moe.3} parent=0 // pred_check_branch
    %16 = sbr.rel (0) target = $region17
  $region16: #{sigma_moe.3} parent=0 // pred_region
    _
  $region17: #{sigma_moe.3} parent=0 // pred_fallthru
    _
  %v17 = vld [vmem:[%s0] sm:$0xff]
  %v18 = vld [vmem:[%s0 + $0x8] sm:$0xff]
  %v19 = vld [vmem:[%s1] sm:$0xff]
  %v20 = vld [vmem:[%s1 + $0x8] sm:$0xff]
  %v21 = vld [vmem:[%s1 + $0x10] sm:$0xff]
  %v22 = vld [vmem:[%s1 + $0x18] sm:$0xff]
  %vm23 = vcmask 261120
  %v25 = vsel %vm23, %v17, 0
  %v28 = vsel %vm23, %v18, 0
  %30 = vmatprep.subr.mxu0 0.0
  %31 = vmatpush1.msra.mxu0 %v19
  %32 = vmatprep.subr.mxu0 0.0
  %33 = vmatpush1.msra.mxu0 %v20
  %34 = vmatprep.subr.mxu0 0.0
  %35 = vmatpush1.msra.mxu0 %v21
  %36 = vmatprep.subr.mxu0 0.0
  %37 = vmatpush1.msra.mxu0 %v22
  %38 = vmatprep.subr.mxu0 0.0
  %39 = vmatpush1.msra.mxu0 0.0
  %40 = vmatprep.subr.mxu0 0.0
  %41 = vmatpush1.msra.mxu0 0.0
  %42 = vmatprep.subr.mxu0 0.0
  %43 = vmatpush1.msra.mxu0 0.0
  %44 = vmatprep.subr.mxu0 0.0
  %45 = vmatpush1.msra.mxu0 0.0
  %46 = vmatprep.subr.mxu0 0.0
  %47 = vmatpush1.msra.mxu0 0.0
  %48 = vmatprep.subr.mxu0 0.0
  %49 = vmatpush1.msra.mxu0 0.0
  %50 = vmatprep.subr.mxu0 0.0
  %51 = vmatpush1.msra.mxu0 0.0
  %52 = vmatprep.subr.mxu0 0.0
  %53 = vmatpush1.msra.mxu0 0.0
  %54 = vmatprep.subr.mxu0 0.0
  %55 = vmatpush1.msra.mxu0 0.0
  %56 = vmatprep.subr.mxu0 0.0
  %57 = vmatpush1.msra.mxu0 0.0
  %58 = vmatprep.subr.mxu0 0.0
  %59 = vmatpush1.msra.mxu0 0.0
  %60 = vmatprep.subr.mxu0 0.0
  %61 = vmatpush1.msra.mxu0 0.0
  %62 = vmatprep.subr.mxu0 0.0
  %63 = vmatpush1.msra.mxu0 0.0
  %64 = vmatprep.subr.mxu0 0.0
  %65 = vmatpush1.msra.mxu0 0.0
  %66 = vmatprep.subr.mxu0 0.0
  %67 = vmatpush1.msra.mxu0 0.0
  %68 = vmatprep.subr.mxu0 0.0
  %69 = vmatpush1.msra.mxu0 0.0
  %70 = vmatprep.subr.mxu0 0.0
  %71 = vmatpush1.msra.mxu0 0.0
  %72 = vmatprep.subr.mxu0 0.0
  %73 = vmatpush1.msra.mxu0 0.0
  %74 = vmatprep.subr.mxu0 0.0
  %75 = vmatpush1.msra.mxu0 0.0
  %76 = vmatprep.subr.mxu0 0.0
  %77 = vmatpush1.msra.mxu0 0.0
  %78 = vmatprep.subr.mxu0 0.0
  %79 = vmatpush1.msra.mxu0 0.0
  %80 = vmatprep.subr.mxu0 0.0
  %81 = vmatpush1.msra.mxu0 0.0
  %82 = vmatprep.subr.mxu0 0.0
  %83 = vmatpush1.msra.mxu0 0.0
  %84 = vmatprep.subr.mxu0 0.0
  %85 = vmatpush1.msra.mxu0 0.0
  %86 = vmatprep.subr.mxu0 0.0
  %87 = vmatpush1.msra.mxu0 0.0
  %88 = vmatprep.subr.mxu0 0.0
  %89 = vmatpush1.msra.mxu0 0.0
  %90 = vmatprep.subr.mxu0 0.0
  %91 = vmatpush1.msra.mxu0 0.0
  %92 = vmatprep.subr.mxu0 0.0
  %93 = vmatpush1.msra.mxu0 0.0
  %94 = vmatprep.mubr.f32.mxu0 0.0
  %95 = vmatmul.mubr.f32.gmra.mrb[0].mxu0 %v25
  %v96 = vpop.f32.mrb[0].mxu0
  %v97 = vadd.f32 0.0, %v96
  %v98 = vpop.f32.mrb[0].mxu0
  %99 = vmatprep.mubr.f32.mxu0 0.0
  %100 = vmatmul.mubr.f32.gmra.mrb[0].mxu0 %v28
  %v101 = vpop.f32.mrb[0].mxu0
  %v102 = vadd.f32 0.0, %v101
  %v103 = vpop.f32.mrb[0].mxu0
  %104 = vdwg.mxu0
  %v105 = vld [vmem:[%s2] sm:$0xff]
  %v106 = vld [vmem:[%s2 + $0x8] sm:$0xff]
  %v107 = vld [vmem:[%s2 + $0x10] sm:$0xff]
  %v108 = vld [vmem:[%s2 + $0x18] sm:$0xff]
  %109 = vmatprep.subr.mxu0 0.0
  %110 = vmatpush1.msra.mxu0 %v105
  %111 = vmatprep.subr.mxu0 0.0
  %112 = vmatpush1.msra.mxu0 %v106
  %113 = vmatprep.subr.mxu0 0.0
  %114 = vmatpush1.msra.mxu0 %v107
  %115 = vmatprep.subr.mxu0 0.0
  %116 = vmatpush1.msra.mxu0 %v108
  %117 = vmatprep.subr.mxu0 0.0
  %118 = vmatpush1.msra.mxu0 0.0
  %119 = vmatprep.subr.mxu0 0.0
  %120 = vmatpush1.msra.mxu0 0.0
  %121 = vmatprep.subr.mxu0 0.0
  %122 = vmatpush1.msra.mxu0 0.0
  %123 = vmatprep.subr.mxu0 0.0
  %124 = vmatpush1.msra.mxu0 0.0
  %125 = vmatprep.subr.mxu0 0.0
  %126 = vmatpush1.msra.mxu0 0.0
  %127 = vmatprep.subr.mxu0 0.0
  %128 = vmatpush1.msra.mxu0 0.0
  %129 = vmatprep.subr.mxu0 0.0
  %130 = vmatpush1.msra.mxu0 0.0
  %131 = vmatprep.subr.mxu0 0.0
  %132 = vmatpush1.msra.mxu0 0.0
  %133 = vmatprep.subr.mxu0 0.0
  %134 = vmatpush1.msra.mxu0 0.0
  %135 = vmatprep.subr.mxu0 0.0
  %136 = vmatpush1.msra.mxu0 0.0
  %137 = vmatprep.subr.mxu0 0.0
  %138 = vmatpush1.msra.mxu0 0.0
  %139 = vmatprep.subr.mxu0 0.0
  %140 = vmatpush1.msra.mxu0 0.0
  %141 = vmatprep.subr.mxu0 0.0
  %142 = vmatpush1.msra.mxu0 0.0
  %143 = vmatprep.subr.mxu0 0.0
  %144 = vmatpush1.msra.mxu0 0.0
  %145 = vmatprep.subr.mxu0 0.0
  %146 = vmatpush1.msra.mxu0 0.0
  %147 = vmatprep.subr.mxu0 0.0
  %148 = vmatpush1.msra.mxu0 0.0
  %149 = vmatprep.subr.mxu0 0.0
  %150 = vmatpush1.msra.mxu0 0.0
  %151 = vmatprep.subr.mxu0 0.0
  %152 = vmatpush1.msra.mxu0 0.0
  %153 = vmatprep.subr.mxu0 0.0
  %154 = vmatpush1.msra.mxu0 0.0
  %155 = vmatprep.subr.mxu0 0.0
  %156 = vmatpush1.msra.mxu0 0.0
  %157 = vmatprep.subr.mxu0 0.0
  %158 = vmatpush1.msra.mxu0 0.0
  %159 = vmatprep.subr.mxu0 0.0
  %160 = vmatpush1.msra.mxu0 0.0
  %161 = vmatprep.subr.mxu0 0.0
  %162 = vmatpush1.msra.mxu0 0.0
  %163 = vmatprep.subr.mxu0 0.0
  %164 = vmatpush1.msra.mxu0 0.0
  %165 = vmatprep.subr.mxu0 0.0
  %166 = vmatpush1.msra.mxu0 0.0
  %167 = vmatprep.subr.mxu0 0.0
  %168 = vmatpush1.msra.mxu0 0.0
  %169 = vmatprep.subr.mxu0 0.0
  %170 = vmatpush1.msra.mxu0 0.0
  %171 = vmatprep.subr.mxu0 0.0
  %172 = vmatpush1.msra.mxu0 0.0
  %173 = vmatprep.mubr.f32.mxu0 0.0
  %174 = vmatmul.mubr.f32.gmra.mrb[0].mxu0 %v25
  %v175 = vpop.f32.mrb[0].mxu0
  %v176 = vadd.f32 0.0, %v175
  %v177 = vpop.f32.mrb[0].mxu0
  %178 = vmatprep.mubr.f32.mxu0 0.0
  %179 = vmatmul.mubr.f32.gmra.mrb[0].mxu0 %v28
  %v180 = vpop.f32.mrb[0].mxu0
  %v181 = vadd.f32 0.0, %v180
  %v182 = vpop.f32.mrb[0].mxu0
  %183 = vdwg.mxu0
  %v184 = vxor.u32 %v97, 2147483648
  %v185 = vxor.u32 %v102, 2147483648
  %v186 = vmul.f32 %v184, 1.442695
  %v187 = vpow.pop %v186
  %v188 = vmul.f32 %v185, 1.442695
  %v189 = vpow.pop %v188
  %v190 = vadd.f32 %v187, 1.0
  %v191 = vadd.f32 %v189, 1.0
  %v192 = vrcp.pop %v190
  %v193 = vmul.f32 1.0, %v192
  %v194 = vrcp.pop %v191
  %v195 = vmul.f32 1.0, %v194
  %v196 = vmul.f32 %v97, %v193
  %v197 = vmul.f32 %v102, %v195
  %v198 = vmul.f32 %v196, %v176
  %v199 = vmul.f32 %v197, %v181
  %v200 = vld [vmem:[%s3] sm:$0xff]
  %v201 = vld [vmem:[%s3 + $0x8] sm:$0xff]
  %v202 = vld [vmem:[%s3 + $0x10] sm:$0xff]
  %v203 = vld [vmem:[%s3 + $0x18] sm:$0xff]
  %v205 = vsel %vm23, %v198, 0
  %v208 = vsel %vm23, %v199, 0
  %210 = vmatprep.subr.mxu0 0.0
  %211 = vmatpush1.msra.mxu0 %v200
  %212 = vmatprep.subr.mxu0 0.0
  %213 = vmatpush1.msra.mxu0 %v201
  %214 = vmatprep.subr.mxu0 0.0
  %215 = vmatpush1.msra.mxu0 %v202
  %216 = vmatprep.subr.mxu0 0.0
  %217 = vmatpush1.msra.mxu0 %v203
  %218 = vmatprep.subr.mxu0 0.0
  %219 = vmatpush1.msra.mxu0 0.0
  %220 = vmatprep.subr.mxu0 0.0
  %221 = vmatpush1.msra.mxu0 0.0
  %222 = vmatprep.subr.mxu0 0.0
  %223 = vmatpush1.msra.mxu0 0.0
  %224 = vmatprep.subr.mxu0 0.0
  %225 = vmatpush1.msra.mxu0 0.0
  %226 = vmatprep.subr.mxu0 0.0
  %227 = vmatpush1.msra.mxu0 0.0
  %228 = vmatprep.subr.mxu0 0.0
  %229 = vmatpush1.msra.mxu0 0.0
  %230 = vmatprep.subr.mxu0 0.0
  %231 = vmatpush1.msra.mxu0 0.0
  %232 = vmatprep.subr.mxu0 0.0
  %233 = vmatpush1.msra.mxu0 0.0
  %234 = vmatprep.subr.mxu0 0.0
  %235 = vmatpush1.msra.mxu0 0.0
  %236 = vmatprep.subr.mxu0 0.0
  %237 = vmatpush1.msra.mxu0 0.0
  %238 = vmatprep.subr.mxu0 0.0
  %239 = vmatpush1.msra.mxu0 0.0
  %240 = vmatprep.subr.mxu0 0.0
  %241 = vmatpush1.msra.mxu0 0.0
  %242 = vmatprep.subr.mxu0 0.0
  %243 = vmatpush1.msra.mxu0 0.0
  %244 = vmatprep.subr.mxu0 0.0
  %245 = vmatpush1.msra.mxu0 0.0
  %246 = vmatprep.subr.mxu0 0.0
  %247 = vmatpush1.msra.mxu0 0.0
  %248 = vmatprep.subr.mxu0 0.0
  %249 = vmatpush1.msra.mxu0 0.0
  %250 = vmatprep.subr.mxu0 0.0
  %251 = vmatpush1.msra.mxu0 0.0
  %252 = vmatprep.subr.mxu0 0.0
  %253 = vmatpush1.msra.mxu0 0.0
  %254 = vmatprep.subr.mxu0 0.0
  %255 = vmatpush1.msra.mxu0 0.0
  %256 = vmatprep.subr.mxu0 0.0
  %257 = vmatpush1.msra.mxu0 0.0
  %258 = vmatprep.subr.mxu0 0.0
  %259 = vmatpush1.msra.mxu0 0.0
  %260 = vmatprep.subr.mxu0 0.0
  %261 = vmatpush1.msra.mxu0 0.0
  %262 = vmatprep.subr.mxu0 0.0
  %263 = vmatpush1.msra.mxu0 0.0
  %264 = vmatprep.subr.mxu0 0.0
  %265 = vmatpush1.msra.mxu0 0.0
  %266 = vmatprep.subr.mxu0 0.0
  %267 = vmatpush1.msra.mxu0 0.0
  %268 = vmatprep.subr.mxu0 0.0
  %269 = vmatpush1.msra.mxu0 0.0
  %270 = vmatprep.subr.mxu0 0.0
  %271 = vmatpush1.msra.mxu0 0.0
  %272 = vmatprep.subr.mxu0 0.0
  %273 = vmatpush1.msra.mxu0 0.0
  %274 = vmatprep.mubr.f32.mxu0 0.0
  %275 = vmatmul.mubr.f32.gmra.mrb[0].mxu0 %v205
  %v276 = vpop.f32.mrb[0].mxu0
  %v277 = vadd.f32 0.0, %v276
  %v278 = vpop.f32.mrb[0].mxu0
  %279 = vmatprep.mubr.f32.mxu0 0.0
  %280 = vmatmul.mubr.f32.gmra.mrb[0].mxu0 %v208
  %v281 = vpop.f32.mrb[0].mxu0
  %v282 = vadd.f32 0.0, %v281
  %v283 = vpop.f32.mrb[0].mxu0
  %284 = vdwg.mxu0
  %285 = vst.msk [vmem:[%s4] sm:$0xff] %vm23, %v277
  %286 = vst.msk [vmem:[%s4 + $0x8] sm:$0xff] %vm23, %v282
  // Predicated region
  $region18: #{sigma_moe.3} parent=0 // pred_check
    _
  $region19: #{sigma_moe.3} parent=0 // pred_check_branch
    %288 = sbr.rel (0) target = $region21
  $region20: #{sigma_moe.3} parent=0 // pred_region
    _
  $region21: #{sigma_moe.3} parent=0 // pred_fallthru
    _
  // Predicated region
  $region22: #{sigma_moe.3} parent=0 // pred_check
    _
  $region23: #{sigma_moe.3} parent=0 // pred_check_branch
    %290 = sbr.rel (0) target = $region25
  $region24: #{sigma_moe.3} parent=0 // pred_region
    _
  $region25: #{sigma_moe.3} parent=0 // pred_fallthru
    _

// kernel: sigma_moe.2
$region0: #{sigma_moe.2}
  #allocation0 [shape = 'u32[]', space=smem, size = 0x4, offset = 0x4, fixed_abs, tag = 'smem constant byte address 0x4 - core index']
  #allocation1 [shape = 'u32[144,128]{1,0:T(1,128)}', space=vmem, size = 0x12000, scoped, tag = 'internal scratch']
  #allocation2 [shape = 'f32[8,32]{1,0:T(8,128)}', space=vmem, size = 0x1000, scoped, tag = 'scratch operand']
  #allocation3 [shape = 's32[1]{0}', space=sflag, size = 0x4, scoped, tag = 'scoped memory for sigma_moe.2']
  #allocation4 [shape = 'u8[512]{0}', space=smem, size = 0x200, scoped, tag = 'prefetched SMEM operand 0']
  #allocation5 [shape = 'u8[512]{0}', space=smem, size = 0x200, scoped, tag = 'prefetched SMEM operand 1']
  %s0 = inlined_call_operand.vmem [shape: s32[8], index: 0, kind: input, shape index: {}]
  %s1 = inlined_call_operand.vmem [shape: s32[8], index: 1, kind: input, shape index: {}]
  %s2 = inlined_call_operand.vmem [shape: f32[64,32], index: 2, kind: input, shape index: {}]
  %s3 = inlined_call_operand.vmem [shape: f32[64,1], index: 3, kind: input, shape index: {}]
  %s4 = inlined_call_operand.vmem [shape: f32[4,32,32], index: 4, kind: input, shape index: {}]
  %s5 = inlined_call_operand.vmem [shape: f32[4,32,32], index: 5, kind: input, shape index: {}]
  %s6 = inlined_call_operand.vmem [shape: f32[4,32,32], index: 6, kind: input, shape index: {}]
  %s7 = inlined_call_operand.vmem [shape: f32[64,32], index: 7, kind: output, shape index: {}]
  %s8 = sld [smem:[#allocation0]]
  $region65: #{sigma_moe.2} parent=0
    _
  %s10 = ssub.s32 1, %s8
  %s11 = scalar_select 0, %s10, %s8
  %s12 = sshll.u32 %s0, 4
  %s13 = int_to_ptr.vmem [resolvable:$true] %s12
  %15 = dma.vmem_to_smem %s13, 16, [#allocation4], [#allocation3]
  %s16 = sshll.u32 %s1, 4
  %s17 = int_to_ptr.vmem [resolvable:$true] %s16
  %19 = dma.vmem_to_smem %s17, 16, [#allocation5], [#allocation3]
  %20 = dma.done [#allocation3], 32
  %21 = sfence
  loop: start=0, step=1, limit=10
  $region2: #{sigma_moe.2} parent=0 // loop_pre_header
    _
  $region3: #{sigma_moe.2} parent=0 // loop_header
    %s23 = sphi 0, %s27
    %p24 = scmp.ge.s32.totalorder %s23, 10
    %s30 = sphi 0, %s42
    %s31 = sphi 0, %s38
    %s32 = sphi 0, %s30
    %s33 = sphi 0, %s31
    %s34 = sphi 0, %s32
    %s35 = sphi 0, %s33
    %s45 = sphi 0, %s47
    %s48 = sphi 0, %s45
    %s49 = sphi 0, %s48
    %s65 = sphi 0, %s49
    %s71 = sphi 0, %s73
    %s74 = sphi 0, %s71
    %s75 = sphi 0, %s74
    %s91 = sphi 0, %s75
    %s101 = sphi 0, %s103
    %s104 = sphi 0, %s101
    %s105 = sphi 0, %s104
    %s121 = sphi 0, %s105
    %s131 = sphi 0, %s133
    %s134 = sphi 0, %s131
    %s135 = sphi 0, %s134
    %s151 = sphi 0, %s135
    %s161 = sphi 0, %s163
    %s164 = sphi 0, %s161
    %s165 = sphi 0, %s164
    %s181 = sphi 0, %s165
    %s187 = sphi 0, %s189
    %s190 = sphi 0, %s187
    %s191 = sphi 0, %s190
    %s207 = sphi 0, %s191
  $region4: #{sigma_moe.2} parent=0 // loop_header_branch
    %26 = sbr.rel (%p24) target = $region8
  $region5: #{sigma_moe.2} parent=0 // loop_body
    %s28 = ssub.s32 %s23, 1
    %s29 = ssub.s32 %s23, 2
    %s36 = sadd.s32 1, %s31
    %p37 = scmp.ge.s32.totalorder %s36, 1
    %s38 = scalar_select %p37, 0, %s36
    %s39 = sadd.s32 1, %s30
    %s40 = scalar_select %p37, %s39, %s30
    %p41 = scmp.ge.s32.totalorder %s40, 8
    %s42 = scalar_select %p41, 0, %s40
    %s43 = ssub.s32 %s30, %s42
    %p44 = scmp.eq.s32.totalorder %s43, 0
    %s46 = sadd.s32 %s45, 1
    %s47 = scalar_select %p44, %s45, %s46
    %p50 = pneg %p44
    %p51 = scmp.eq.s32.totalorder %s23, 7
    %p52 = por %p50, %p51
    %p53 = scmp.ne.s32.totalorder %s45, %s48
    %p54 = scmp.eq.s32.totalorder %s23, 0
    %p55 = por %p53, %p54
    %p56 = scmp.ne.s32.totalorder %s45, %s48
    %p57 = scmp.eq.s32.totalorder %s28, 7
    %p58 = por %p56, %p57
    %p59 = scmp.ne.s32.totalorder %s48, %s49
    %p60 = scmp.eq.s32.totalorder %s28, 0
    %p61 = por %p59, %p60
    %p62 = scmp.ne.s32.totalorder %s48, %s49
    %p63 = scmp.eq.s32.totalorder %s29, 7
    %p64 = por %p62, %p63
    %p66 = scmp.ne.s32.totalorder %s49, %s65
    %p67 = scmp.eq.s32.totalorder %s29, 0
    %p68 = por %p66, %p67
    %s69 = ssub.s32 %s30, %s42
    %p70 = scmp.eq.s32.totalorder %s69, 0
    %s72 = sadd.s32 %s71, 1
    %s73 = scalar_select %p70, %s71, %s72
    %p76 = pneg %p70
    %p77 = scmp.eq.s32.totalorder %s23, 7
    %p78 = por %p76, %p77
    %p79 = scmp.ne.s32.totalorder %s71, %s74
    %p80 = scmp.eq.s32.totalorder %s23, 0
    %p81 = por %p79, %p80
    %p82 = scmp.ne.s32.totalorder %s71, %s74
    %p83 = scmp.eq.s32.totalorder %s28, 7
    %p84 = por %p82, %p83
    %p85 = scmp.ne.s32.totalorder %s74, %s75
    %p86 = scmp.eq.s32.totalorder %s28, 0
    %p87 = por %p85, %p86
    %p88 = scmp.ne.s32.totalorder %s74, %s75
    %p89 = scmp.eq.s32.totalorder %s29, 7
    %p90 = por %p88, %p89
    %p92 = scmp.ne.s32.totalorder %s75, %s91
    %p93 = scmp.eq.s32.totalorder %s29, 0
    %p94 = por %p92, %p93
    %s95 = sld [smem:[#allocation4 + %s30]]
    %s96 = sld [smem:[#allocation4 + %s42]]
    %s97 = ssub.s32 %s95, %s96
    %s98 = ssub.s32 %s31, %s38
    %s99 = sor.u32 %s97, %s98
    %p100 = scmp.eq.s32.totalorder %s99, 0
    %s102 = sadd.s32 %s101, 1
    %s103 = scalar_select %p100, %s101, %s102
    %p106 = pneg %p100
    %p107 = scmp.eq.s32.totalorder %s23, 7
    %p108 = por %p106, %p107
    %p109 = scmp.ne.s32.totalorder %s101, %s104
    %p110 = scmp.eq.s32.totalorder %s23, 0
    %p111 = por %p109, %p110
    %p112 = scmp.ne.s32.totalorder %s101, %s104
    %p113 = scmp.eq.s32.totalorder %s28, 7
    %p114 = por %p112, %p113
    %p115 = scmp.ne.s32.totalorder %s104, %s105
    %p116 = scmp.eq.s32.totalorder %s28, 0
    %p117 = por %p115, %p116
    %p118 = scmp.ne.s32.totalorder %s104, %s105
    %p119 = scmp.eq.s32.totalorder %s29, 7
    %p120 = por %p118, %p119
    %p122 = scmp.ne.s32.totalorder %s105, %s121
    %p123 = scmp.eq.s32.totalorder %s29, 0
    %p124 = por %p122, %p123
    %s125 = sld [smem:[#allocation4 + %s30]]
    %s126 = sld [smem:[#allocation4 + %s42]]
    %s127 = ssub.s32 %s125, %s126
    %s128 = ssub.s32 %s31, %s38
    %s129 = sor.u32 %s127, %s128
    %p130 = scmp.eq.s32.totalorder %s129, 0
    %s132 = sadd.s32 %s131, 1
    %s133 = scalar_select %p130, %s131, %s132
    %p136 = pneg %p130
    %p137 = scmp.eq.s32.totalorder %s23, 7
    %p138 = por %p136, %p137
    %p139 = scmp.ne.s32.totalorder %s131, %s134
    %p140 = scmp.eq.s32.totalorder %s23, 0
    %p141 = por %p139, %p140
    %p142 = scmp.ne.s32.totalorder %s131, %s134
    %p143 = scmp.eq.s32.totalorder %s28, 7
    %p144 = por %p142, %p143
    %p145 = scmp.ne.s32.totalorder %s134, %s135
    %p146 = scmp.eq.s32.totalorder %s28, 0
    %p147 = por %p145, %p146
    %p148 = scmp.ne.s32.totalorder %s134, %s135
    %p149 = scmp.eq.s32.totalorder %s29, 7
    %p150 = por %p148, %p149
    %p152 = scmp.ne.s32.totalorder %s135, %s151
    %p153 = scmp.eq.s32.totalorder %s29, 0
    %p154 = por %p152, %p153
    %s155 = sld [smem:[#allocation4 + %s30]]
    %s156 = sld [smem:[#allocation4 + %s42]]
    %s157 = ssub.s32 %s155, %s156
    %s158 = ssub.s32 %s31, %s38
    %s159 = sor.u32 %s157, %s158
    %p160 = scmp.eq.s32.totalorder %s159, 0
    %s162 = sadd.s32 %s161, 1
    %s163 = scalar_select %p160, %s161, %s162
    %p166 = pneg %p160
    %p167 = scmp.eq.s32.totalorder %s23, 7
    %p168 = por %p166, %p167
    %p169 = scmp.ne.s32.totalorder %s161, %s164
    %p170 = scmp.eq.s32.totalorder %s23, 0
    %p171 = por %p169, %p170
    %p172 = scmp.ne.s32.totalorder %s161, %s164
    %p173 = scmp.eq.s32.totalorder %s28, 7
    %p174 = por %p172, %p173
    %p175 = scmp.ne.s32.totalorder %s164, %s165
    %p176 = scmp.eq.s32.totalorder %s28, 0
    %p177 = por %p175, %p176
    %p178 = scmp.ne.s32.totalorder %s164, %s165
    %p179 = scmp.eq.s32.totalorder %s29, 7
    %p180 = por %p178, %p179
    %p182 = scmp.ne.s32.totalorder %s165, %s181
    %p183 = scmp.eq.s32.totalorder %s29, 0
    %p184 = por %p182, %p183
    %s185 = ssub.s32 %s30, %s42
    %p186 = scmp.eq.s32.totalorder %s185, 0
    %s188 = sadd.s32 %s187, 1
    %s189 = scalar_select %p186, %s187, %s188
    %p192 = pneg %p186
    %p193 = scmp.eq.s32.totalorder %s23, 7
    %p194 = por %p192, %p193
    %p195 = scmp.ne.s32.totalorder %s187, %s190
    %p196 = scmp.eq.s32.totalorder %s23, 0
    %p197 = por %p195, %p196
    %p198 = scmp.ne.s32.totalorder %s187, %s190
    %p199 = scmp.eq.s32.totalorder %s28, 7
    %p200 = por %p198, %p199
    %p201 = scmp.ne.s32.totalorder %s190, %s191
    %p202 = scmp.eq.s32.totalorder %s28, 0
    %p203 = por %p201, %p202
    %p204 = scmp.ne.s32.totalorder %s190, %s191
    %p205 = scmp.eq.s32.totalorder %s29, 7
    %p206 = por %p204, %p205
    %p208 = scmp.ne.s32.totalorder %s191, %s207
    %p209 = scmp.eq.s32.totalorder %s29, 0
    %p210 = por %p208, %p209
    %p211 = scmp.le.s32.totalorder 1, %s23
    %p212 = scmp.lt.s32.totalorder %s23, 9
    %p213 = pnand %p211, %p212
    %p214 = pneg %p213
    // Predicated region
    $region9: #{sigma_moe.2} parent=5 // pred_check
      _
    $region10: #{sigma_moe.2} parent=5 // pred_check_branch
      %216 = sbr.rel (%p213) target = $region12
    $region11: #{sigma_moe.2} parent=5 // pred_region
      %s217 = ssub.s32 %s23, 1
    $region12: #{sigma_moe.2} parent=5 // pred_fallthru
      _
    %p218 = scmp.lt.s32.totalorder %s23, 8
    // Predicated region
    $region13: #{sigma_moe.2} parent=5 // pred_check
      %p219 = pneg %p218
    $region14: #{sigma_moe.2} parent=5 // pred_check_branch
      %221 = sbr.rel (%p219) target = $region16
    $region15: #{sigma_moe.2} parent=5 // pred_region
      // Predicated region
      $region17: #{sigma_moe.2} parent=15 // pred_check
        %p222 = pneg %p55
      $region18: #{sigma_moe.2} parent=15 // pred_check_branch
        %224 = sbr.rel (%p222) target = $region20
      $region19: #{sigma_moe.2} parent=15 // pred_region
        %p225 = scmp.lt.s32.totalorder %s30, 7
        %s226 = scalar_select %p225, %s30, 7
        %s227 = smul.addr %s226, 8
        %s228 = scalar_lea.vmem %s2, %s227
      $region20: #{sigma_moe.2} parent=15 // pred_fallthru
        _
      // Predicated region
      $region21: #{sigma_moe.2} parent=15 // pred_check
        %p229 = pneg %p81
      $region22: #{sigma_moe.2} parent=15 // pred_check_branch
        %231 = sbr.rel (%p229) target = $region24
      $region23: #{sigma_moe.2} parent=15 // pred_region
        %p232 = scmp.lt.s32.totalorder %s30, 7
        %s233 = scalar_select %p232, %s30, 7
        %s234 = smul.addr %s233, 8
        %s235 = scalar_lea.vmem %s3, %s234
      $region24: #{sigma_moe.2} parent=15 // pred_fallthru
        _
      // Predicated region
      $region25: #{sigma_moe.2} parent=15 // pred_check
        %p236 = pneg %p111
      $region26: #{sigma_moe.2} parent=15 // pred_check_branch
        %238 = sbr.rel (%p236) target = $region28
      $region27: #{sigma_moe.2} parent=15 // pred_region
        %s239 = sld [smem:[#allocation4 + %s30]]
        %p240 = scmp.lt.s32.totalorder %s239, 3
        %s241 = scalar_select %p240, %s239, 3
        %p242 = scmp.lt.s32.totalorder %s31, 0
        %s243 = scalar_select %p242, %s31, 0
        %s244 = smul.addr %s241, 4
        %s245 = sadd.s32 %s243, %s244
        %s246 = smul.addr %s245, 8
        %s247 = scalar_lea.vmem %s4, %s246
        %s248 = sld [smem:[#allocation4 + %s30]]
      $region28: #{sigma_moe.2} parent=15 // pred_fallthru
        _
      // Predicated region
      $region29: #{sigma_moe.2} parent=15 // pred_check
        %p249 = pneg %p141
      $region30: #{sigma_moe.2} parent=15 // pred_check_branch
        %251 = sbr.rel (%p249) target = $region32
      $region31: #{sigma_moe.2} parent=15 // pred_region
        %s252 = sld [smem:[#allocation4 + %s30]]
        %p253 = scmp.lt.s32.totalorder %s252, 3
        %s254 = scalar_select %p253, %s252, 3
        %p255 = scmp.lt.s32.totalorder %s31, 0
        %s256 = scalar_select %p255, %s31, 0
        %s257 = smul.addr %s254, 4
        %s258 = sadd.s32 %s256, %s257
        %s259 = smul.addr %s258, 8
        %s260 = scalar_lea.vmem %s5, %s259
        %s261 = sld [smem:[#allocation4 + %s30]]
      $region32: #{sigma_moe.2} parent=15 // pred_fallthru
        _
      // Predicated region
      $region33: #{sigma_moe.2} parent=15 // pred_check
        %p262 = pneg %p171
      $region34: #{sigma_moe.2} parent=15 // pred_check_branch
        %264 = sbr.rel (%p262) target = $region36
      $region35: #{sigma_moe.2} parent=15 // pred_region
        %s265 = sld [smem:[#allocation4 + %s30]]
        %s266 = smul.u32 4, %s31
        %p267 = scmp.lt.s32.totalorder %s265, 3
        %s268 = scalar_select %p267, %s265, 3
        %p269 = scmp.lt.s32.totalorder %s266, 3
        %s270 = scalar_select %p269, %s266, 3
        %s271 = smul.addr %s268, 4
        %s272 = sadd.s32 %s270, %s271
        %s273 = smul.addr %s272, 8
        %s274 = scalar_lea.vmem %s6, %s273
        %s275 = sld [smem:[#allocation4 + %s30]]
        %s276 = smul.u32 4, %s31
      $region36: #{sigma_moe.2} parent=15 // pred_fallthru
        _
    $region16: #{sigma_moe.2} parent=5 // pred_fallthru
      _
    %p277 = scmp.le.s32.totalorder 1, %s23
    %p278 = scmp.lt.s32.totalorder %s23, 9
    %p279 = pnand %p277, %p278
    %p280 = pneg %p279
    // Predicated region
    $region37: #{sigma_moe.2} parent=5 // pred_check
      _
    $region38: #{sigma_moe.2} parent=5 // pred_check_branch
      %282 = sbr.rel (%p279) target = $region40
    $region39: #{sigma_moe.2} parent=5 // pred_region
      %s283 = ssub.s32 %s23, 1
      %p284 = scmp.lt.s32.totalorder %s32, 7
      %s285 = scalar_select %p284, %s32, 7
      %s286 = smul.addr %s285, 8
      %s287 = scalar_lea.vmem %s2, %s286
      %p288 = pneg %p61
      %p289 = pneg %p58
      %p290 = scmp.lt.s32.totalorder %s32, 7
      %s291 = scalar_select %p290, %s32, 7
      %s292 = smul.addr %s291, 8
      %s293 = scalar_lea.vmem %s3, %s292
      %p294 = pneg %p87
      %p295 = pneg %p84
      %s296 = sld [smem:[#allocation4 + %s32]]
      %p297 = scmp.lt.s32.totalorder %s296, 3
      %s298 = scalar_select %p297, %s296, 3
      %p299 = scmp.lt.s32.totalorder %s33, 0
      %s300 = scalar_select %p299, %s33, 0
      %s301 = smul.addr %s298, 4
      %s302 = sadd.s32 %s300, %s301
      %s303 = smul.addr %s302, 8
      %s304 = scalar_lea.vmem %s4, %s303
      %p305 = pneg %p117
      %p306 = pneg %p114
      %s307 = sld [smem:[#allocation4 + %s32]]
      %p308 = scmp.lt.s32.totalorder %s307, 3
      %s309 = scalar_select %p308, %s307, 3
      %p310 = scmp.lt.s32.totalorder %s33, 0
      %s311 = scalar_select %p310, %s33, 0
      %s312 = smul.addr %s309, 4
      %s313 = sadd.s32 %s311, %s312
      %s314 = smul.addr %s313, 8
      %s315 = scalar_lea.vmem %s5, %s314
      %p316 = pneg %p147
      %p317 = pneg %p144
      %s318 = sld [smem:[#allocation4 + %s32]]
      %s319 = smul.u32 4, %s33
      %p320 = scmp.lt.s32.totalorder %s318, 3
      %s321 = scalar_select %p320, %s318, 3
      %p322 = scmp.lt.s32.totalorder %s319, 3
      %s323 = scalar_select %p322, %s319, 3
      %s324 = smul.addr %s321, 4
      %s325 = sadd.s32 %s323, %s324
      %s326 = smul.addr %s325, 8
      %s327 = scalar_lea.vmem %s6, %s326
      %p328 = pneg %p177
      %p329 = pneg %p174
      %p330 = pneg %p203
      %p331 = pneg %p200
      %p332 = scmp.lt.s32.totalorder %s32, 7
      %s333 = scalar_select %p332, %s32, 7
      %s334 = smul.addr %s333, 8
      %s335 = scalar_lea.vmem %s7, %s334
      %p336 = scmp.lt.s32.totalorder %s32, 7
      %s337 = scalar_select %p336, %s32, 7
      %s338 = smul.addr %s337, 8
      %s339 = scalar_lea.vmem %s2, %s338
      %p340 = scmp.lt.s32.totalorder %s32, 7
      %s341 = scalar_select %p340, %s32, 7
      %s342 = smul.addr %s341, 8
      %s343 = scalar_lea.vmem %s3, %s342
      %s344 = sld [smem:[#allocation4 + %s32]]
      %p345 = scmp.lt.s32.totalorder %s344, 3
      %s346 = scalar_select %p345, %s344, 3
      %p347 = scmp.lt.s32.totalorder %s33, 0
      %s348 = scalar_select %p347, %s33, 0
      %s349 = smul.addr %s346, 4
      %s350 = sadd.s32 %s348, %s349
      %s351 = smul.addr %s350, 8
      %s352 = scalar_lea.vmem %s4, %s351
      %s353 = sld [smem:[#allocation4 + %s32]]
      %s354 = sld [smem:[#allocation4 + %s32]]
      %p355 = scmp.lt.s32.totalorder %s354, 3
      %s356 = scalar_select %p355, %s354, 3
      %p357 = scmp.lt.s32.totalorder %s33, 0
      %s358 = scalar_select %p357, %s33, 0
      %s359 = smul.addr %s356, 4
      %s360 = sadd.s32 %s358, %s359
      %s361 = smul.addr %s360, 8
      %s362 = scalar_lea.vmem %s5, %s361
      %s363 = sld [smem:[#allocation4 + %s32]]
      %s364 = sld [smem:[#allocation4 + %s32]]
      %s365 = smul.u32 4, %s33
      %p366 = scmp.lt.s32.totalorder %s364, 3
      %s367 = scalar_select %p366, %s364, 3
      %p368 = scmp.lt.s32.totalorder %s365, 3
      %s369 = scalar_select %p368, %s365, 3
      %s370 = smul.addr %s367, 4
      %s371 = sadd.s32 %s369, %s370
      %s372 = smul.addr %s371, 8
      %s373 = scalar_lea.vmem %s6, %s372
      %s374 = sld [smem:[#allocation4 + %s32]]
      %s375 = smul.u32 4, %s33
      %p376 = scmp.lt.s32.totalorder %s32, 7
      %s377 = scalar_select %p376, %s32, 7
      %s378 = smul.addr %s377, 8
      %s379 = scalar_lea.vmem %s7, %s378
      %p380 = scmp.eq.s32.totalorder %s33, 0
      // Predicated region
      $region41: #{sigma_moe.2} parent=39 // pred_check
        %p381 = pneg %p380
      $region42: #{sigma_moe.2} parent=39 // pred_check_branch
        %383 = sbr.rel (%p381) target = $region44
      $region43: #{sigma_moe.2} parent=39 // pred_region
        %vm384 = vcmask 261120
        %385 = vst.msk [vmem:[#allocation2] sm:$0xff] %vm384, 0.0
      $region44: #{sigma_moe.2} parent=39 // pred_fallthru
        _
      %s386 = sld [smem:[#allocation5 + %s32]]
      %p387 = scmp.ne.s32.totalorder %s386, 0
      // Predicated region
      $region45: #{sigma_moe.2} parent=39 // pred_check
        %p388 = pneg %p387
      $region46: #{sigma_moe.2} parent=39 // pred_check_branch
        %390 = sbr.rel (%p388) target = $region48
      $region47: #{sigma_moe.2} parent=39 // pred_region
        %v391 = vld [vmem:[%s339] sm:$0xff]
        %v392 = vld [vmem:[%s352] sm:$0xff]
        %v393 = vld [vmem:[%s352 + $0x8] sm:$0xff]
        %v394 = vld [vmem:[%s352 + $0x10] sm:$0xff]
        %v395 = vld [vmem:[%s352 + $0x18] sm:$0xff]
        %vm396 = vcmask 261120
        %v398 = vsel %vm396, %v391, 0
        %400 = vmatprep.subr.mxu0 0.0
        %401 = vmatpush1.msra.mxu0 %v392
        %402 = vmatprep.subr.mxu0 0.0
        %403 = vmatpush1.msra.mxu0 %v393
        %404 = vmatprep.subr.mxu0 0.0
        %405 = vmatpush1.msra.mxu0 %v394
        %406 = vmatprep.subr.mxu0 0.0
        %407 = vmatpush1.msra.mxu0 %v395
        %408 = vmatprep.subr.mxu0 0.0
        %409 = vmatpush1.msra.mxu0 0.0
        %410 = vmatprep.subr.mxu0 0.0
        %411 = vmatpush1.msra.mxu0 0.0
        %412 = vmatprep.subr.mxu0 0.0
        %413 = vmatpush1.msra.mxu0 0.0
        %414 = vmatprep.subr.mxu0 0.0
        %415 = vmatpush1.msra.mxu0 0.0
        %416 = vmatprep.subr.mxu0 0.0
        %417 = vmatpush1.msra.mxu0 0.0
        %418 = vmatprep.subr.mxu0 0.0
        %419 = vmatpush1.msra.mxu0 0.0
        %420 = vmatprep.subr.mxu0 0.0
        %421 = vmatpush1.msra.mxu0 0.0
        %422 = vmatprep.subr.mxu0 0.0
        %423 = vmatpush1.msra.mxu0 0.0
        %424 = vmatprep.subr.mxu0 0.0
        %425 = vmatpush1.msra.mxu0 0.0
        %426 = vmatprep.subr.mxu0 0.0
        %427 = vmatpush1.msra.mxu0 0.0
        %428 = vmatprep.subr.mxu0 0.0
        %429 = vmatpush1.msra.mxu0 0.0
        %430 = vmatprep.subr.mxu0 0.0
        %431 = vmatpush1.msra.mxu0 0.0
        %432 = vmatprep.subr.mxu0 0.0
        %433 = vmatpush1.msra.mxu0 0.0
        %434 = vmatprep.subr.mxu0 0.0
        %435 = vmatpush1.msra.mxu0 0.0
        %436 = vmatprep.subr.mxu0 0.0
        %437 = vmatpush1.msra.mxu0 0.0
        %438 = vmatprep.subr.mxu0 0.0
        %439 = vmatpush1.msra.mxu0 0.0
        %440 = vmatprep.subr.mxu0 0.0
        %441 = vmatpush1.msra.mxu0 0.0
        %442 = vmatprep.subr.mxu0 0.0
        %443 = vmatpush1.msra.mxu0 0.0
        %444 = vmatprep.subr.mxu0 0.0
        %445 = vmatpush1.msra.mxu0 0.0
        %446 = vmatprep.subr.mxu0 0.0
        %447 = vmatpush1.msra.mxu0 0.0
        %448 = vmatprep.subr.mxu0 0.0
        %449 = vmatpush1.msra.mxu0 0.0
        %450 = vmatprep.subr.mxu0 0.0
        %451 = vmatpush1.msra.mxu0 0.0
        %452 = vmatprep.subr.mxu0 0.0
        %453 = vmatpush1.msra.mxu0 0.0
        %454 = vmatprep.subr.mxu0 0.0
        %455 = vmatpush1.msra.mxu0 0.0
        %456 = vmatprep.subr.mxu0 0.0
        %457 = vmatpush1.msra.mxu0 0.0
        %458 = vmatprep.subr.mxu0 0.0
        %459 = vmatpush1.msra.mxu0 0.0
        %460 = vmatprep.subr.mxu0 0.0
        %461 = vmatpush1.msra.mxu0 0.0
        %462 = vmatprep.subr.mxu0 0.0
        %463 = vmatpush1.msra.mxu0 0.0
        %464 = vmatprep.mubr.f32.mxu0 0.0
        %465 = vmatmul.mubr.f32.gmra.mrb[0].mxu0 %v398
        %v466 = vpop.f32.mrb[0].mxu0
        %v467 = vadd.f32 0.0, %v466
        %v468 = vpop.f32.mrb[0].mxu0
        %469 = vdwg.mxu0
        %v470 = vld [vmem:[%s362] sm:$0xff]
        %v471 = vld [vmem:[%s362 + $0x8] sm:$0xff]
        %v472 = vld [vmem:[%s362 + $0x10] sm:$0xff]
        %v473 = vld [vmem:[%s362 + $0x18] sm:$0xff]
        %474 = vmatprep.subr.mxu0 0.0
        %475 = vmatpush1.msra.mxu0 %v470
        %476 = vmatprep.subr.mxu0 0.0
        %477 = vmatpush1.msra.mxu0 %v471
        %478 = vmatprep.subr.mxu0 0.0
        %479 = vmatpush1.msra.mxu0 %v472
        %480 = vmatprep.subr.mxu0 0.0
        %481 = vmatpush1.msra.mxu0 %v473
        %482 = vmatprep.subr.mxu0 0.0
        %483 = vmatpush1.msra.mxu0 0.0
        %484 = vmatprep.subr.mxu0 0.0
        %485 = vmatpush1.msra.mxu0 0.0
        %486 = vmatprep.subr.mxu0 0.0
        %487 = vmatpush1.msra.mxu0 0.0
        %488 = vmatprep.subr.mxu0 0.0
        %489 = vmatpush1.msra.mxu0 0.0
        %490 = vmatprep.subr.mxu0 0.0
        %491 = vmatpush1.msra.mxu0 0.0
        %492 = vmatprep.subr.mxu0 0.0
        %493 = vmatpush1.msra.mxu0 0.0
        %494 = vmatprep.subr.mxu0 0.0
        %495 = vmatpush1.msra.mxu0 0.0
        %496 = vmatprep.subr.mxu0 0.0
        %497 = vmatpush1.msra.mxu0 0.0
        %498 = vmatprep.subr.mxu0 0.0
        %499 = vmatpush1.msra.mxu0 0.0
        %500 = vmatprep.subr.mxu0 0.0
        %501 = vmatpush1.msra.mxu0 0.0
        %502 = vmatprep.subr.mxu0 0.0
        %503 = vmatpush1.msra.mxu0 0.0
        %504 = vmatprep.subr.mxu0 0.0
        %505 = vmatpush1.msra.mxu0 0.0
        %506 = vmatprep.subr.mxu0 0.0
        %507 = vmatpush1.msra.mxu0 0.0
        %508 = vmatprep.subr.mxu0 0.0
        %509 = vmatpush1.msra.mxu0 0.0
        %510 = vmatprep.subr.mxu0 0.0
        %511 = vmatpush1.msra.mxu0 0.0
        %512 = vmatprep.subr.mxu0 0.0
        %513 = vmatpush1.msra.mxu0 0.0
        %514 = vmatprep.subr.mxu0 0.0
        %515 = vmatpush1.msra.mxu0 0.0
        %516 = vmatprep.subr.mxu0 0.0
        %517 = vmatpush1.msra.mxu0 0.0
        %518 = vmatprep.subr.mxu0 0.0
        %519 = vmatpush1.msra.mxu0 0.0
        %520 = vmatprep.subr.mxu0 0.0
        %521 = vmatpush1.msra.mxu0 0.0
        %522 = vmatprep.subr.mxu0 0.0
        %523 = vmatpush1.msra.mxu0 0.0
        %524 = vmatprep.subr.mxu0 0.0
        %525 = vmatpush1.msra.mxu0 0.0
        %526 = vmatprep.subr.mxu0 0.0
        %527 = vmatpush1.msra.mxu0 0.0
        %528 = vmatprep.subr.mxu0 0.0
        %529 = vmatpush1.msra.mxu0 0.0
        %530 = vmatprep.subr.mxu0 0.0
        %531 = vmatpush1.msra.mxu0 0.0
        %532 = vmatprep.subr.mxu0 0.0
        %533 = vmatpush1.msra.mxu0 0.0
        %534 = vmatprep.subr.mxu0 0.0
        %535 = vmatpush1.msra.mxu0 0.0
        %536 = vmatprep.subr.mxu0 0.0
        %537 = vmatpush1.msra.mxu0 0.0
        %538 = vmatprep.mubr.f32.mxu0 0.0
        %539 = vmatmul.mubr.f32.gmra.mrb[0].mxu0 %v398
        %v540 = vpop.f32.mrb[0].mxu0
        %v541 = vadd.f32 0.0, %v540
        %v542 = vpop.f32.mrb[0].mxu0
        %543 = vdwg.mxu0
        %v544 = vxor.u32 %v467, 2147483648
        %v545 = vmul.f32 %v544, 1.442695
        %v546 = vpow.pop %v545
        %v547 = vadd.f32 %v546, 1.0
        %v548 = vrcp.pop %v547
        %v549 = vmul.f32 1.0, %v548
        %v550 = vmul.f32 %v467, %v549
        %v551 = vmul.f32 %v550, %v541
        %v552 = vld [vmem:[#allocation2] sm:$0xff]
        %v553 = vld [vmem:[%s373] sm:$0xff]
        %v554 = vld [vmem:[%s373 + $0x8] sm:$0xff]
        %v555 = vld [vmem:[%s373 + $0x10] sm:$0xff]
        %v556 = vld [vmem:[%s373 + $0x18] sm:$0xff]
        %v558 = vsel %vm396, %v551, 0
        %560 = vmatprep.subr.mxu0 0.0
        %561 = vmatpush1.msra.mxu0 %v553
        %562 = vmatprep.subr.mxu0 0.0
        %563 = vmatpush1.msra.mxu0 %v554
        %564 = vmatprep.subr.mxu0 0.0
        %565 = vmatpush1.msra.mxu0 %v555
        %566 = vmatprep.subr.mxu0 0.0
        %567 = vmatpush1.msra.mxu0 %v556
        %568 = vmatprep.subr.mxu0 0.0
        %569 = vmatpush1.msra.mxu0 0.0
        %570 = vmatprep.subr.mxu0 0.0
        %571 = vmatpush1.msra.mxu0 0.0
        %572 = vmatprep.subr.mxu0 0.0
        %573 = vmatpush1.msra.mxu0 0.0
        %574 = vmatprep.subr.mxu0 0.0
        %575 = vmatpush1.msra.mxu0 0.0
        %576 = vmatprep.subr.mxu0 0.0
        %577 = vmatpush1.msra.mxu0 0.0
        %578 = vmatprep.subr.mxu0 0.0
        %579 = vmatpush1.msra.mxu0 0.0
        %580 = vmatprep.subr.mxu0 0.0
        %581 = vmatpush1.msra.mxu0 0.0
        %582 = vmatprep.subr.mxu0 0.0
        %583 = vmatpush1.msra.mxu0 0.0
        %584 = vmatprep.subr.mxu0 0.0
        %585 = vmatpush1.msra.mxu0 0.0
        %586 = vmatprep.subr.mxu0 0.0
        %587 = vmatpush1.msra.mxu0 0.0
        %588 = vmatprep.subr.mxu0 0.0
        %589 = vmatpush1.msra.mxu0 0.0
        %590 = vmatprep.subr.mxu0 0.0
        %591 = vmatpush1.msra.mxu0 0.0
        %592 = vmatprep.subr.mxu0 0.0
        %593 = vmatpush1.msra.mxu0 0.0
        %594 = vmatprep.subr.mxu0 0.0
        %595 = vmatpush1.msra.mxu0 0.0
        %596 = vmatprep.subr.mxu0 0.0
        %597 = vmatpush1.msra.mxu0 0.0
        %598 = vmatprep.subr.mxu0 0.0
        %599 = vmatpush1.msra.mxu0 0.0
        %600 = vmatprep.subr.mxu0 0.0
        %601 = vmatpush1.msra.mxu0 0.0
        %602 = vmatprep.subr.mxu0 0.0
        %603 = vmatpush1.msra.mxu0 0.0
        %604 = vmatprep.subr.mxu0 0.0
        %605 = vmatpush1.msra.mxu0 0.0
        %606 = vmatprep.subr.mxu0 0.0
        %607 = vmatpush1.msra.mxu0 0.0
        %608 = vmatprep.subr.mxu0 0.0
        %609 = vmatpush1.msra.mxu0 0.0
        %610 = vmatprep.subr.mxu0 0.0
        %611 = vmatpush1.msra.mxu0 0.0
        %612 = vmatprep.subr.mxu0 0.0
        %613 = vmatpush1.msra.mxu0 0.0
        %614 = vmatprep.subr.mxu0 0.0
        %615 = vmatpush1.msra.mxu0 0.0
        %616 = vmatprep.subr.mxu0 0.0
        %617 = vmatpush1.msra.mxu0 0.0
        %618 = vmatprep.subr.mxu0 0.0
        %619 = vmatpush1.msra.mxu0 0.0
        %620 = vmatprep.subr.mxu0 0.0
        %621 = vmatpush1.msra.mxu0 0.0
        %622 = vmatprep.subr.mxu0 0.0
        %623 = vmatpush1.msra.mxu0 0.0
        %624 = vmatprep.mubr.f32.mxu0 0.0
        %625 = vmatmul.mubr.f32.gmra.mrb[0].mxu0 %v558
        %v626 = vpop.f32.mrb[0].mxu0
        %v627 = vadd.f32 0.0, %v626
        %v628 = vpop.f32.mrb[0].mxu0
        %629 = vdwg.mxu0
        %v630 = vadd.f32 %v552, %v627
        %631 = vst.msk [vmem:[#allocation2] sm:$0xff] %vm396, %v630
      $region48: #{sigma_moe.2} parent=39 // pred_fallthru
        _
      // Predicated region
      $region49: #{sigma_moe.2} parent=39 // pred_check
        %p632 = pneg %p380
      $region50: #{sigma_moe.2} parent=39 // pred_check_branch
        %634 = sbr.rel (%p632) target = $region52
      $region51: #{sigma_moe.2} parent=39 // pred_region
        %v635 = vld [vmem:[%s343] sm:$0xff]
        %v636 = vld [vmem:[#allocation2] sm:$0xff]
        %638 = vset.pattern.permute.xlu0 0
        %639 = vperm.xlu0 %638, %v635
        %v640 = vpop.permute.xlu0 %639
        %v642 = vmul.f32 %v640, %v636
        %vm643 = vcmask 261120
        %644 = vst.msk [vmem:[%s379] sm:$0xff] %vm643, %v642
      $region52: #{sigma_moe.2} parent=39 // pred_fallthru
        _
      %p645 = scmp.lt.s32.totalorder %s32, 7
      %s646 = scalar_select %p645, %s32, 7
      %s647 = smul.addr %s646, 8
      %s648 = scalar_lea.vmem %s7, %s647
      // Predicated region
      $region53: #{sigma_moe.2} parent=39 // pred_check
        %p649 = pneg %p200
      $region54: #{sigma_moe.2} parent=39 // pred_check_branch
        %651 = sbr.rel (%p649) target = $region56
      $region55: #{sigma_moe.2} parent=39 // pred_region
        _
      $region56: #{sigma_moe.2} parent=39 // pred_fallthru
        _
    $region40: #{sigma_moe.2} parent=5 // pred_fallthru
      _
    %p652 = scmp.le.s32.totalorder 2, %s23
    // Predicated region
    $region57: #{sigma_moe.2} parent=5 // pred_check
      %p653 = pneg %p652
    $region58: #{sigma_moe.2} parent=5 // pred_check_branch
      %655 = sbr.rel (%p653) target = $region60
    $region59: #{sigma_moe.2} parent=5 // pred_region
      %s656 = ssub.s32 %s23, 2
      // Predicated region
      $region61: #{sigma_moe.2} parent=59 // pred_check
        %p657 = pneg %p206
      $region62: #{sigma_moe.2} parent=59 // pred_check_branch
        %659 = sbr.rel (%p657) target = $region64
      $region63: #{sigma_moe.2} parent=59 // pred_region
        %p660 = scmp.lt.s32.totalorder %s34, 7
        %s661 = scalar_select %p660, %s34, 7
        %s662 = smul.addr %s661, 8
        %s663 = scalar_lea.vmem %s7, %s662
      $region64: #{sigma_moe.2} parent=59 // pred_fallthru
        _
    $region60: #{sigma_moe.2} parent=5 // pred_fallthru
      _
  $region6: #{sigma_moe.2} parent=0 // loop_footer
    %s27 = sadd.s32 1, %s23
  $region7: #{sigma_moe.2} parent=0 // loop_footer_branch
    %22 = sbr.rel target = $region3
  $region8: #{sigma_moe.2} parent=0 // loop_exit
    _

</llo_original>
